<compile_context>
chip_gen: v5e
topology: v5e:2x2
jax: 0.10.0
libtpu: 0.0.40
codegen_flags: <defaults>
</compile_context>

<pallas_src>
import functools

import jax
import jax.numpy as jnp
import numpy as np
from jax.experimental import pallas as pl
from jax.experimental.pallas import tpu as pltpu


# ----------------------------- Pallas kernel -------------------------------
def _ec_cut_kernel(ei_ref, eat_ref, ps_ref, pd_ref, w1e_ref, b1_ref, w2_ref,
                   b2_ref, score_ref):
    n_pad = ps_ref.shape[1]
    te = ei_ref.shape[1]

    src = ei_ref[0:1, :]                                    # (1, TE) int32
    dst = ei_ref[1:2, :]
    node_ids = jax.lax.broadcasted_iota(jnp.int32, (n_pad, te), 0)
    # Gather-as-matmul: one-hot built on the VPU, contracted on the MXU
    # against the pre-projected node tables (exact f32 row selection).
    oh_src = (node_ids == src).astype(jnp.float32)          # (Npad, TE)
    oh_dst = (node_ids == dst).astype(jnp.float32)

    h = jnp.dot(ps_ref[...], oh_src, preferred_element_type=jnp.float32)
    h = h + jnp.dot(pd_ref[...], oh_dst, preferred_element_type=jnp.float32)
    h = h + jnp.dot(w1e_ref[...], eat_ref[...],
                    preferred_element_type=jnp.float32)
    h = jnp.maximum(h + b1_ref[...], 0.0)                   # (H, TE) f32

    # Width-1 output layer: VPU multiply + cross-sublane reduce (XLU) instead
    # of an MXU pass that would waste a full systolic pump on a 1-wide result.
    logit = jnp.sum(h * w2_ref[...], axis=0, keepdims=True) + b2_ref[0, 0]
    score_ref[...] = jax.nn.sigmoid(logit)                  # (1, TE) f32


def ec_cut_scores(edge_index, edge_attr_t, p_src, p_dst, w1e_t, b1_t, w2, b2,
                  *, tile_e: int = 8192):
    """Edge-classifier MLP scores with the per-edge gather fused in-kernel.

    edge_index : [2, E] int32 src/dst indices
    edge_attr_t: [De, E] bf16 edge features (edges on the lane axis)
    p_src/p_dst: [H, Npad] f32 node tables pre-projected through layer 1
    w1e_t      : [H, De] bf16;  b1_t, w2: [H, 1] f32;  b2: [1, 1] f32
    returns scores [E] f32
    """
    _, E = edge_index.shape
    De = edge_attr_t.shape[0]
    H, n_pad = p_src.shape

    # Effective tile: large (amortizes ~0.35 us per-grid-step overhead) but no
    # larger than E rounded up to the 128-lane granule; keep >= 2 parallel
    # tiles when the graph allows so both v7x TensorCores get work.
    e_granule = pl.cdiv(E, 128) * 128
    tile_e = int(min(tile_e, e_granule))
    if tile_e >= e_granule and e_granule >= 256:
        tile_e = pl.cdiv(e_granule // 2, 128) * 128
    n_tiles = pl.cdiv(E, tile_e)
    e_pad = n_tiles * tile_e
    if e_pad != E:
        # pad index 0 (valid node) / zero attrs; padded lanes are sliced off
        edge_index = jnp.pad(edge_index, ((0, 0), (0, e_pad - E)))
        edge_attr_t = jnp.pad(edge_attr_t, ((0, 0), (0, e_pad - E)))

    # VMEM at tile_e=8192: two (Npad, TE) f32 one-hots + (H, TE) hidden temp
    # + double-buffered input/output blocks ~= a few MiB, well under every
    # chip's scoped default (v5e 16 MiB).  For much larger tile sweeps set
    # pltpu.CompilerParams(vmem_limit_bytes=...) explicitly (v7x: 64 MiB phys).
    scores = pl.pallas_call(
        _ec_cut_kernel,
        out_shape=jax.ShapeDtypeStruct((1, e_pad), jnp.float32),
        grid_spec=pltpu.PrefetchScalarGridSpec(
            num_scalar_prefetch=0,
            grid=(n_tiles,),
            in_specs=[
                pl.BlockSpec((2, tile_e), lambda i: (0, i)),    # edge_index
                pl.BlockSpec((De, tile_e), lambda i: (0, i)),   # edge_attr^T
                pl.BlockSpec((H, n_pad), lambda i: (0, 0)),     # p_src
                pl.BlockSpec((H, n_pad), lambda i: (0, 0)),     # p_dst
                pl.BlockSpec((H, De), lambda i: (0, 0)),        # W1_edge^T
                pl.BlockSpec((H, 1), lambda i: (0, 0)),         # b1
                pl.BlockSpec((H, 1), lambda i: (0, 0)),         # w2
                pl.BlockSpec(memory_space=pltpu.MemorySpace.SMEM),  # b2
            ],
            out_specs=pl.BlockSpec((1, tile_e), lambda i: (0, i)),
        ),
        compiler_params=pltpu.CompilerParams(
            dimension_semantics=("parallel",)),
    )(edge_index, edge_attr_t, p_src, p_dst, w1e_t, b1_t, w2, b2)
    return scores[0, :E]


# ------------------------------ ECCut wrapper -------------------------------
def ec_cut_forward(x, edge_index, edge_attr, params, *, thld: float):
    """JAX equivalent of ECCut.forward (ec = small per-edge MLP).

    x:          [N, Dn] node features
    edge_index: [2, E]  int32 src/dst indices
    edge_attr:  [E, De] edge features
    Returns dict with ec_score, mask, and the (compacted, padded) subgraph.
    """
    n_nodes, d_node = x.shape

    w1 = params["w1"].astype(jnp.float32)             # (F, H)
    w1_src = w1[:d_node]                               # (Dn, H)
    w1_dst = w1[d_node:2 * d_node]                     # (Dn, H)
    w1_edge = w1[2 * d_node:]                          # (De, H)

    # Project the (tiny) node table through layer 1 once; the per-edge gather
    # then happens inside the kernel as a one-hot matmul, so no [F, E] feature
    # matrix is ever materialized / transposed / padded in HBM.
    xf = x.astype(jnp.float32)
    n_pad = pl.cdiv(n_nodes, 8) * 8
    p_src = jnp.pad((xf @ w1_src).T, ((0, 0), (0, n_pad - n_nodes)))
    p_dst = jnp.pad((xf @ w1_dst).T, ((0, 0), (0, n_pad - n_nodes)))
    # TODO(synk): for large node counts (projected table no longer VMEM
    # resident / one-hot too tall) switch to an in-kernel dynamic gather on a
    # VMEM node table instead of the one-hot matmul.

    scores = ec_cut_scores(
        edge_index.astype(jnp.int32),
        edge_attr.astype(jnp.bfloat16).T,              # (De, E) bf16 stream
        p_src, p_dst,
        w1_edge.T.astype(jnp.bfloat16),                # (H, De)
        params["b1"].astype(jnp.float32).T,            # (H, 1)
        params["w2"].astype(jnp.float32),              # (H, 1)
        params["b2"].astype(jnp.float32),              # (1, 1)
    )

    mask = scores > thld                               # [E] bool (wrapper side)

    # edge_subgraph(mask): JAX needs static shapes, so compact kept edges to
    # the front (stable) via O(E) cumsum + scatter and return the kept count.
    # TODO(synk): true dynamic-shape edge_subgraph (PyG) has no static-shape
    # TPU equivalent; consumers should slice with num_edges_kept on host.
    keep = mask.astype(jnp.int32)
    num_edges_kept = keep.sum()
    kept_pos = jnp.cumsum(keep) - 1                       # position if kept
    drop_pos = num_edges_kept + jnp.cumsum(1 - keep) - 1  # position if dropped
    dest = jnp.where(mask, kept_pos, drop_pos)            # permutation
    edge_index_sub = jnp.zeros_like(edge_index).at[:, dest].set(edge_index)
    edge_attr_sub = jnp.zeros_like(edge_attr).at[dest].set(edge_attr)

    return {
        "ec_score": scores,
        "mask": mask,
        "edge_index_sub": edge_index_sub,
        "edge_attr_sub": edge_attr_sub,
        "num_edges_kept": num_edges_kept,
    }


# --------------------------------- main -------------------------------------
if __name__ == "__main__":
    key = jax.random.PRNGKey(0)
    k_x, k_ei, k_ea, k_w1, k_b1, k_w2, k_b2 = jax.random.split(key, 7)

    N, E = 64, 1000          # nodes, edges (E not a multiple of 128: pads tail)
    D_NODE, D_EDGE = 8, 4    # node / edge feature dims
    F = 2 * D_NODE + D_EDGE  # per-edge MLP input dim
    H = 32                   # hidden dim
    THLD = 0.5

    x = jax.random.normal(k_x, (N, D_NODE), dtype=jnp.float32)
    edge_index = jax.random.randint(k_ei, (2, E), 0, N, dtype=jnp.int32)
    edge_attr = jax.random.normal(k_ea, (E, D_EDGE), dtype=jnp.float32)

    # deterministic synthetic edge-classifier parameters
    params = {
        "w1": 0.3 * jax.random.normal(k_w1, (F, H), dtype=jnp.float32),
        "b1": 0.1 * jax.random.normal(k_b1, (1, H), dtype=jnp.float32),
        "w2": 0.3 * jax.random.normal(k_w2, (H, 1), dtype=jnp.float32),
        "b2": 0.1 * jax.random.normal(k_b2, (1, 1), dtype=jnp.float32),
    }

    out = jax.jit(functools.partial(ec_cut_forward, thld=THLD))(
        x, edge_index, edge_attr, params)
    jax.block_until_ready(out)

    # ---- pure-JAX f32 reference of the hot path ----
    src, dst = edge_index[0], edge_index[1]
    feat = jnp.concatenate([x[src], x[dst], edge_attr], axis=-1)
    h = jnp.maximum(feat @ params["w1"] + params["b1"], 0.0)
    w_ref = jax.nn.sigmoid(h @ params["w2"] + params["b2"])[:, 0]
    # edge_attr stream is bf16 in-kernel -> loose tolerance vs the f32 ref
    assert jnp.allclose(out["ec_score"], w_ref, atol=1e-2), (
        float(jnp.max(jnp.abs(out["ec_score"] - w_ref))))
    # mask is defined w.r.t. the kernel's own scores (bf16 could flip an edge
    # sitting exactly at the threshold relative to the f32 reference)
    assert jnp.array_equal(out["mask"], out["ec_score"] > THLD)

    # compaction check: kept edges first, stable order, dropped edges behind
    mask_np = np.asarray(out["mask"])
    ei_np = np.asarray(edge_index)
    ea_np = np.asarray(edge_attr)
    exp_ei = np.concatenate([ei_np[:, mask_np], ei_np[:, ~mask_np]], axis=1)
    exp_ea = np.concatenate([ea_np[mask_np], ea_np[~mask_np]], axis=0)
    assert np.array_equal(np.asarray(out["edge_index_sub"]), exp_ei)
    assert np.allclose(np.asarray(out["edge_attr_sub"]), exp_ea)
    assert int(out["num_edges_kept"]) == int(mask_np.sum())

    print("KERNEL_OK")
</pallas_src>

<mosaic_0001>
module attributes {stable_mosaic.version = 11 : i64} {
  func.func @_ec_cut_kernel(%arg0: i32, %arg1: memref<2x512xi32, #tpu.memory_space<vmem>>, %arg2: memref<4x512xbf16, #tpu.memory_space<vmem>>, %arg3: memref<32x64xf32, #tpu.memory_space<vmem>>, %arg4: memref<32x64xf32, #tpu.memory_space<vmem>>, %arg5: memref<32x4xbf16, #tpu.memory_space<vmem>>, %arg6: memref<32x1xf32, #tpu.memory_space<vmem>>, %arg7: memref<32x1xf32, #tpu.memory_space<vmem>>, %arg8: memref<1x1xf32, #tpu.memory_space<smem>>, %arg9: memref<1x512xf32, #tpu.memory_space<vmem>>) attributes {dimension_semantics = [#tpu.dimension_semantics<parallel>], iteration_bounds = array<i64: 2>, scalar_prefetch = 0 : i64, scratch_operands = 0 : i64, tpu.core_type = #tpu.core_type<tc>, window_params = [{transform_indices = @transform_0, window_bounds = array<i64: 2, 512>}, {transform_indices = @transform_1, window_bounds = array<i64: 4, 512>}, {pipeline_mode = #tpu.pipeline_mode<synchronous>, transform_indices = @transform_2, window_bounds = array<i64: 32, 64>}, {pipeline_mode = #tpu.pipeline_mode<synchronous>, transform_indices = @transform_3, window_bounds = array<i64: 32, 64>}, {pipeline_mode = #tpu.pipeline_mode<synchronous>, transform_indices = @transform_4, window_bounds = array<i64: 32, 4>}, {pipeline_mode = #tpu.pipeline_mode<synchronous>, transform_indices = @transform_5, window_bounds = array<i64: 32, 1>}, {pipeline_mode = #tpu.pipeline_mode<synchronous>, transform_indices = @transform_6, window_bounds = array<i64: 32, 1>}, {transform_indices = @transform_7, window_bounds = array<i64: 1, 1>}, {transform_indices = @transform_8, window_bounds = array<i64: 1, 512>}]} {
    %c0 = arith.constant 0 : index
    %c0_0 = arith.constant 0 : index
    %0 = vector.load %arg1[%c0, %c0_0] : memref<2x512xi32, #tpu.memory_space<vmem>>, vector<1x512xi32>
    %c1 = arith.constant 1 : index
    %c0_1 = arith.constant 0 : index
    %1 = vector.load %arg1[%c1, %c0_1] : memref<2x512xi32, #tpu.memory_space<vmem>>, vector<1x512xi32>
    %2 = tpu.iota {dimensions = array<i32: 0>} : vector<64x512xi32>
    %3 = vector.broadcast %0 : vector<1x512xi32> to vector<64x512xi32>
    %4 = arith.cmpi eq, %2, %3 : vector<64x512xi32>
    %5 = arith.extui %4 : vector<64x512xi1> to vector<64x512xi32>
    %6 = arith.sitofp %5 : vector<64x512xi32> to vector<64x512xf32>
    %7 = vector.broadcast %1 : vector<1x512xi32> to vector<64x512xi32>
    %8 = arith.cmpi eq, %2, %7 : vector<64x512xi32>
    %9 = arith.extui %8 : vector<64x512xi1> to vector<64x512xi32>
    %10 = arith.sitofp %9 : vector<64x512xi32> to vector<64x512xf32>
    %c0_2 = arith.constant 0 : index
    %c0_3 = arith.constant 0 : index
    %11 = vector.load %arg3[%c0_2, %c0_3] : memref<32x64xf32, #tpu.memory_space<vmem>>, vector<32x64xf32>
    %cst = arith.constant dense<0.000000e+00> : vector<32x512xf32>
    %12 = tpu.matmul %11, %6, %cst {dimension_numbers = #tpu.dot_dimension_numbers<[1], [0], [0], [1], [0, 0, 1, 1], [], []>} : vector<32x64xf32>, vector<64x512xf32>, vector<32x512xf32> -> vector<32x512xf32>
    %c0_4 = arith.constant 0 : index
    %c0_5 = arith.constant 0 : index
    %13 = vector.load %arg4[%c0_4, %c0_5] : memref<32x64xf32, #tpu.memory_space<vmem>>, vector<32x64xf32>
    %cst_6 = arith.constant dense<0.000000e+00> : vector<32x512xf32>
    %14 = tpu.matmul %13, %10, %cst_6 {dimension_numbers = #tpu.dot_dimension_numbers<[1], [0], [0], [1], [0, 0, 1, 1], [], []>} : vector<32x64xf32>, vector<64x512xf32>, vector<32x512xf32> -> vector<32x512xf32>
    %15 = arith.addf %12, %14 : vector<32x512xf32>
    %c0_7 = arith.constant 0 : index
    %c0_8 = arith.constant 0 : index
    %16 = vector.load %arg5[%c0_7, %c0_8] : memref<32x4xbf16, #tpu.memory_space<vmem>>, vector<32x4xbf16>
    %c0_9 = arith.constant 0 : index
    %c0_10 = arith.constant 0 : index
    %17 = vector.load %arg2[%c0_9, %c0_10] : memref<4x512xbf16, #tpu.memory_space<vmem>>, vector<4x512xbf16>
    %cst_11 = arith.constant dense<0.000000e+00> : vector<32x512xf32>
    %18 = tpu.matmul %16, %17, %cst_11 {dimension_numbers = #tpu.dot_dimension_numbers<[1], [0], [0], [1], [0, 0, 1, 1], [], []>} : vector<32x4xbf16>, vector<4x512xbf16>, vector<32x512xf32> -> vector<32x512xf32>
    %19 = arith.addf %15, %18 : vector<32x512xf32>
    %c0_12 = arith.constant 0 : index
    %c0_13 = arith.constant 0 : index
    %20 = vector.load %arg6[%c0_12, %c0_13] : memref<32x1xf32, #tpu.memory_space<vmem>>, vector<32x1xf32>
    %21 = vector.broadcast %20 : vector<32x1xf32> to vector<32x512xf32>
    %22 = arith.addf %19, %21 : vector<32x512xf32>
    %cst_14 = arith.constant 0.000000e+00 : f32
    %23 = vector.broadcast %cst_14 : f32 to vector<32x512xf32>
    %24 = arith.maximumf %22, %23 : vector<32x512xf32>
    %c0_15 = arith.constant 0 : index
    %c0_16 = arith.constant 0 : index
    %25 = vector.load %arg7[%c0_15, %c0_16] : memref<32x1xf32, #tpu.memory_space<vmem>>, vector<32x1xf32>
    %26 = vector.broadcast %25 : vector<32x1xf32> to vector<32x512xf32>
    %27 = arith.mulf %24, %26 : vector<32x512xf32>
    %cst_17 = arith.constant dense<0.000000e+00> : vector<512xf32>
    %28 = vector.multi_reduction <add>, %27, %cst_17 [0] : vector<32x512xf32> to vector<512xf32>
    %29 = vector.shape_cast %28 : vector<512xf32> to vector<1x512xf32>
    %c0_18 = arith.constant 0 : index
    %c0_19 = arith.constant 0 : index
    %30 = memref.load %arg8[%c0_18, %c0_19] : memref<1x1xf32, #tpu.memory_space<smem>>
    %31 = vector.broadcast %30 : f32 to vector<1x512xf32>
    %32 = arith.addf %29, %31 : vector<1x512xf32>
    %33 = arith.negf %32 : vector<1x512xf32>
    %34 = math.exp %33 : vector<1x512xf32>
    %cst_20 = arith.constant 1.000000e+00 : f32
    %35 = vector.broadcast %cst_20 : f32 to vector<1x512xf32>
    %36 = arith.addf %35, %34 : vector<1x512xf32>
    %37 = arith.divf %35, %36 : vector<1x512xf32>
    %c0_21 = arith.constant 0 : index
    %c0_22 = arith.constant 0 : index
    %38 = vector.load %arg9[%c0_21, %c0_22] : memref<1x512xf32, #tpu.memory_space<vmem>>, vector<1x512xf32>
    tpu.vector_store %arg9[%c0_21, %c0_22], %37 {strides = array<i32>} : memref<1x512xf32, #tpu.memory_space<vmem>>, vector<1x512xf32>,
    return
  }
  func.func @transform_0(%arg0: i32) -> (i32, i32) {
    %c0_i32 = arith.constant 0 : i32
    %c0_i32_0 = arith.constant 0 : i32
    return %c0_i32, %arg0 : i32, i32
  }
  func.func @transform_1(%arg0: i32) -> (i32, i32) {
    %c0_i32 = arith.constant 0 : i32
    %c0_i32_0 = arith.constant 0 : i32
    return %c0_i32, %arg0 : i32, i32
  }
  func.func @transform_2(%arg0: i32) -> (i32, i32) {
    %c0_i32 = arith.constant 0 : i32
    %c0_i32_0 = arith.constant 0 : i32
    %c0_i32_1 = arith.constant 0 : i32
    return %c0_i32, %c0_i32_0 : i32, i32
  }
  func.func @transform_3(%arg0: i32) -> (i32, i32) {
    %c0_i32 = arith.constant 0 : i32
    %c0_i32_0 = arith.constant 0 : i32
    %c0_i32_1 = arith.constant 0 : i32
    return %c0_i32, %c0_i32_0 : i32, i32
  }
  func.func @transform_4(%arg0: i32) -> (i32, i32) {
    %c0_i32 = arith.constant 0 : i32
    %c0_i32_0 = arith.constant 0 : i32
    %c0_i32_1 = arith.constant 0 : i32
    return %c0_i32, %c0_i32_0 : i32, i32
  }
  func.func @transform_5(%arg0: i32) -> (i32, i32) {
    %c0_i32 = arith.constant 0 : i32
    %c0_i32_0 = arith.constant 0 : i32
    %c0_i32_1 = arith.constant 0 : i32
    return %c0_i32, %c0_i32_0 : i32, i32
  }
  func.func @transform_6(%arg0: i32) -> (i32, i32) {
    %c0_i32 = arith.constant 0 : i32
    %c0_i32_0 = arith.constant 0 : i32
    %c0_i32_1 = arith.constant 0 : i32
    return %c0_i32, %c0_i32_0 : i32, i32
  }
  func.func @transform_7(%arg0: i32) -> (i32, i32) {
    %c0_i32 = arith.constant 0 : i32
    %c0_i32_0 = arith.constant 0 : i32
    %c0_i32_1 = arith.constant 0 : i32
    return %c0_i32, %c0_i32_0 : i32, i32
  }
  func.func @transform_8(%arg0: i32) -> (i32, i32) {
    %c0_i32 = arith.constant 0 : i32
    %c0_i32_0 = arith.constant 0 : i32
    return %c0_i32, %arg0 : i32, i32
  }
}

</mosaic_0001>

<llo_original>
// kernel: ec_cut_forward.1
$region0: #{ec_cut_forward.1}
  #allocation0 [shape = 'u32[]', space=smem, size = 0x4, offset = 0x4, fixed_abs, tag = 'smem constant byte address 0x4 - core index']
  #allocation1 [shape = 'u32[72,128]{1,0:T(1,128)}', space=vmem, size = 0x9000, scoped, tag = 'internal scratch']
  #allocation2 [shape = 'f32[1,1]{1,0:T(1,128)S(6)}', space=smem, size = 0x200, scoped, tag = 'scoped memory for ec_cut_forward.1']
  %s0 = inlined_call_operand.vmem [shape: s32[2,1024], index: 0, kind: input, shape index: {}]
  %s1 = inlined_call_operand.vmem [shape: bf16[4,1024], index: 1, kind: input, shape index: {}]
  %s2 = inlined_call_operand.vmem [shape: f32[32,64], index: 2, kind: input, shape index: {}]
  %s3 = inlined_call_operand.vmem [shape: f32[32,64], index: 3, kind: input, shape index: {}]
  %s4 = inlined_call_operand.vmem [shape: bf16[32,4], index: 4, kind: input, shape index: {}]
  %s5 = inlined_call_operand.vmem [shape: f32[32,1], index: 5, kind: input, shape index: {}]
  %s6 = inlined_call_operand.vmem [shape: f32[32,1], index: 6, kind: input, shape index: {}]
  %s7 = inlined_call_operand.<no memory space> [shape: f32[1,1], index: 7, kind: input, shape index: {}]
  %s8 = inlined_call_operand.vmem [shape: f32[1,1024], index: 8, kind: output, shape index: {}]
  %s9 = sld [smem:[#allocation0]]
  $region65: #{ec_cut_forward.1} parent=0
    _
  %s11 = ssub.s32 1, %s9
  %s12 = scalar_select 0, %s11, %s9
  %13 = sst [smem:[#allocation2]] %s7
  loop: start=0, step=1, limit=4
  $region2: #{ec_cut_forward.1} parent=0 // loop_pre_header
    _
  $region3: #{ec_cut_forward.1} parent=0 // loop_header
    %s15 = sphi 0, %s19
    %p16 = scmp.ge.s32.totalorder %s15, 4
    %s25 = sphi 0, %s27
    %s28 = sphi 0, %s25
    %s29 = sphi 0, %s28
    %s45 = sphi 0, %s29
    %s51 = sphi 0, %s53
    %s54 = sphi 0, %s51
    %s55 = sphi 0, %s54
    %s71 = sphi 0, %s55
    %s75 = sphi 0, %s75
    %s77 = sphi 0, %s75
    %s78 = sphi 0, %s77
    %s92 = sphi 0, %s78
    %s96 = sphi 0, %s96
    %s98 = sphi 0, %s96
    %s99 = sphi 0, %s98
    %s113 = sphi 0, %s99
    %s117 = sphi 0, %s117
    %s119 = sphi 0, %s117
    %s120 = sphi 0, %s119
    %s134 = sphi 0, %s120
    %s138 = sphi 0, %s138
    %s140 = sphi 0, %s138
    %s141 = sphi 0, %s140
    %s155 = sphi 0, %s141
    %s159 = sphi 0, %s159
    %s161 = sphi 0, %s159
    %s162 = sphi 0, %s161
    %s176 = sphi 0, %s162
    %s180 = sphi 0, %s180
    %s182 = sphi 0, %s180
    %s183 = sphi 0, %s182
    %s197 = sphi 0, %s183
    %s203 = sphi 0, %s205
    %s206 = sphi 0, %s203
    %s207 = sphi 0, %s206
    %s223 = sphi 0, %s207
  $region4: #{ec_cut_forward.1} parent=0 // loop_header_branch
    %18 = sbr.rel (%p16) target = $region8
  $region5: #{ec_cut_forward.1} parent=0 // loop_body
    %s20 = ssub.s32 %s15, 1
    %s21 = ssub.s32 %s15, 2
    %s22 = sadd.s32 %s15, 1
    %s23 = ssub.s32 %s15, %s22
    %p24 = scmp.eq.s32.totalorder %s23, 0
    %s26 = sadd.s32 %s25, 1
    %s27 = scalar_select %p24, %s25, %s26
    %p30 = pneg %p24
    %p31 = scmp.eq.s32.totalorder %s15, 1
    %p32 = por %p30, %p31
    %p33 = scmp.ne.s32.totalorder %s25, %s28
    %p34 = scmp.eq.s32.totalorder %s15, 0
    %p35 = por %p33, %p34
    %p36 = scmp.ne.s32.totalorder %s25, %s28
    %p37 = scmp.eq.s32.totalorder %s20, 1
    %p38 = por %p36, %p37
    %p39 = scmp.ne.s32.totalorder %s28, %s29
    %p40 = scmp.eq.s32.totalorder %s20, 0
    %p41 = por %p39, %p40
    %p42 = scmp.ne.s32.totalorder %s28, %s29
    %p43 = scmp.eq.s32.totalorder %s21, 1
    %p44 = por %p42, %p43
    %p46 = scmp.ne.s32.totalorder %s29, %s45
    %p47 = scmp.eq.s32.totalorder %s21, 0
    %p48 = por %p46, %p47
    %s49 = ssub.s32 %s15, %s22
    %p50 = scmp.eq.s32.totalorder %s49, 0
    %s52 = sadd.s32 %s51, 1
    %s53 = scalar_select %p50, %s51, %s52
    %p56 = pneg %p50
    %p57 = scmp.eq.s32.totalorder %s15, 1
    %p58 = por %p56, %p57
    %p59 = scmp.ne.s32.totalorder %s51, %s54
    %p60 = scmp.eq.s32.totalorder %s15, 0
    %p61 = por %p59, %p60
    %p62 = scmp.ne.s32.totalorder %s51, %s54
    %p63 = scmp.eq.s32.totalorder %s20, 1
    %p64 = por %p62, %p63
    %p65 = scmp.ne.s32.totalorder %s54, %s55
    %p66 = scmp.eq.s32.totalorder %s20, 0
    %p67 = por %p65, %p66
    %p68 = scmp.ne.s32.totalorder %s54, %s55
    %p69 = scmp.eq.s32.totalorder %s21, 1
    %p70 = por %p68, %p69
    %p72 = scmp.ne.s32.totalorder %s55, %s71
    %p73 = scmp.eq.s32.totalorder %s21, 0
    %p74 = por %p72, %p73
    %s76 = sadd.s32 %s75, 1
    %p79 = scmp.eq.s32.totalorder %s15, 1
    %p80 = scmp.ne.s32.totalorder %s75, %s77
    %p81 = scmp.eq.s32.totalorder %s15, 0
    %p82 = por %p80, %p81
    %p83 = scmp.ne.s32.totalorder %s75, %s77
    %p84 = scmp.eq.s32.totalorder %s20, 1
    %p85 = por %p83, %p84
    %p86 = scmp.ne.s32.totalorder %s77, %s78
    %p87 = scmp.eq.s32.totalorder %s20, 0
    %p88 = por %p86, %p87
    %p89 = scmp.ne.s32.totalorder %s77, %s78
    %p90 = scmp.eq.s32.totalorder %s21, 1
    %p91 = por %p89, %p90
    %p93 = scmp.ne.s32.totalorder %s78, %s92
    %p94 = scmp.eq.s32.totalorder %s21, 0
    %p95 = por %p93, %p94
    %s97 = sadd.s32 %s96, 1
    %p100 = scmp.eq.s32.totalorder %s15, 1
    %p101 = scmp.ne.s32.totalorder %s96, %s98
    %p102 = scmp.eq.s32.totalorder %s15, 0
    %p103 = por %p101, %p102
    %p104 = scmp.ne.s32.totalorder %s96, %s98
    %p105 = scmp.eq.s32.totalorder %s20, 1
    %p106 = por %p104, %p105
    %p107 = scmp.ne.s32.totalorder %s98, %s99
    %p108 = scmp.eq.s32.totalorder %s20, 0
    %p109 = por %p107, %p108
    %p110 = scmp.ne.s32.totalorder %s98, %s99
    %p111 = scmp.eq.s32.totalorder %s21, 1
    %p112 = por %p110, %p111
    %p114 = scmp.ne.s32.totalorder %s99, %s113
    %p115 = scmp.eq.s32.totalorder %s21, 0
    %p116 = por %p114, %p115
    %s118 = sadd.s32 %s117, 1
    %p121 = scmp.eq.s32.totalorder %s15, 1
    %p122 = scmp.ne.s32.totalorder %s117, %s119
    %p123 = scmp.eq.s32.totalorder %s15, 0
    %p124 = por %p122, %p123
    %p125 = scmp.ne.s32.totalorder %s117, %s119
    %p126 = scmp.eq.s32.totalorder %s20, 1
    %p127 = por %p125, %p126
    %p128 = scmp.ne.s32.totalorder %s119, %s120
    %p129 = scmp.eq.s32.totalorder %s20, 0
    %p130 = por %p128, %p129
    %p131 = scmp.ne.s32.totalorder %s119, %s120
    %p132 = scmp.eq.s32.totalorder %s21, 1
    %p133 = por %p131, %p132
    %p135 = scmp.ne.s32.totalorder %s120, %s134
    %p136 = scmp.eq.s32.totalorder %s21, 0
    %p137 = por %p135, %p136
    %s139 = sadd.s32 %s138, 1
    %p142 = scmp.eq.s32.totalorder %s15, 1
    %p143 = scmp.ne.s32.totalorder %s138, %s140
    %p144 = scmp.eq.s32.totalorder %s15, 0
    %p145 = por %p143, %p144
    %p146 = scmp.ne.s32.totalorder %s138, %s140
    %p147 = scmp.eq.s32.totalorder %s20, 1
    %p148 = por %p146, %p147
    %p149 = scmp.ne.s32.totalorder %s140, %s141
    %p150 = scmp.eq.s32.totalorder %s20, 0
    %p151 = por %p149, %p150
    %p152 = scmp.ne.s32.totalorder %s140, %s141
    %p153 = scmp.eq.s32.totalorder %s21, 1
    %p154 = por %p152, %p153
    %p156 = scmp.ne.s32.totalorder %s141, %s155
    %p157 = scmp.eq.s32.totalorder %s21, 0
    %p158 = por %p156, %p157
    %s160 = sadd.s32 %s159, 1
    %p163 = scmp.eq.s32.totalorder %s15, 1
    %p164 = scmp.ne.s32.totalorder %s159, %s161
    %p165 = scmp.eq.s32.totalorder %s15, 0
    %p166 = por %p164, %p165
    %p167 = scmp.ne.s32.totalorder %s159, %s161
    %p168 = scmp.eq.s32.totalorder %s20, 1
    %p169 = por %p167, %p168
    %p170 = scmp.ne.s32.totalorder %s161, %s162
    %p171 = scmp.eq.s32.totalorder %s20, 0
    %p172 = por %p170, %p171
    %p173 = scmp.ne.s32.totalorder %s161, %s162
    %p174 = scmp.eq.s32.totalorder %s21, 1
    %p175 = por %p173, %p174
    %p177 = scmp.ne.s32.totalorder %s162, %s176
    %p178 = scmp.eq.s32.totalorder %s21, 0
    %p179 = por %p177, %p178
    %s181 = sadd.s32 %s180, 1
    %p184 = scmp.eq.s32.totalorder %s15, 1
    %p185 = scmp.ne.s32.totalorder %s180, %s182
    %p186 = scmp.eq.s32.totalorder %s15, 0
    %p187 = por %p185, %p186
    %p188 = scmp.ne.s32.totalorder %s180, %s182
    %p189 = scmp.eq.s32.totalorder %s20, 1
    %p190 = por %p188, %p189
    %p191 = scmp.ne.s32.totalorder %s182, %s183
    %p192 = scmp.eq.s32.totalorder %s20, 0
    %p193 = por %p191, %p192
    %p194 = scmp.ne.s32.totalorder %s182, %s183
    %p195 = scmp.eq.s32.totalorder %s21, 1
    %p196 = por %p194, %p195
    %p198 = scmp.ne.s32.totalorder %s183, %s197
    %p199 = scmp.eq.s32.totalorder %s21, 0
    %p200 = por %p198, %p199
    %s201 = ssub.s32 %s15, %s22
    %p202 = scmp.eq.s32.totalorder %s201, 0
    %s204 = sadd.s32 %s203, 1
    %s205 = scalar_select %p202, %s203, %s204
    %p208 = pneg %p202
    %p209 = scmp.eq.s32.totalorder %s15, 1
    %p210 = por %p208, %p209
    %p211 = scmp.ne.s32.totalorder %s203, %s206
    %p212 = scmp.eq.s32.totalorder %s15, 0
    %p213 = por %p211, %p212
    %p214 = scmp.ne.s32.totalorder %s203, %s206
    %p215 = scmp.eq.s32.totalorder %s20, 1
    %p216 = por %p214, %p215
    %p217 = scmp.ne.s32.totalorder %s206, %s207
    %p218 = scmp.eq.s32.totalorder %s20, 0
    %p219 = por %p217, %p218
    %p220 = scmp.ne.s32.totalorder %s206, %s207
    %p221 = scmp.eq.s32.totalorder %s21, 1
    %p222 = por %p220, %p221
    %p224 = scmp.ne.s32.totalorder %s207, %s223
    %p225 = scmp.eq.s32.totalorder %s21, 0
    %p226 = por %p224, %p225
    %p227 = scmp.le.s32.totalorder 1, %s15
    %p228 = scmp.lt.s32.totalorder %s15, 3
    %p229 = pnand %p227, %p228
    %p230 = pneg %p229
    // Predicated region
    $region9: #{ec_cut_forward.1} parent=5 // pred_check
      _
    $region10: #{ec_cut_forward.1} parent=5 // pred_check_branch
      %232 = sbr.rel (%p229) target = $region12
    $region11: #{ec_cut_forward.1} parent=5 // pred_region
      %s233 = ssub.s32 %s15, 1
      // Predicated region
      $region13: #{ec_cut_forward.1} parent=11 // pred_check
        %p234 = pneg %p88
      $region14: #{ec_cut_forward.1} parent=11 // pred_check_branch
        %236 = sbr.rel (%p234) target = $region16
      $region15: #{ec_cut_forward.1} parent=11 // pred_region
        _
      $region16: #{ec_cut_forward.1} parent=11 // pred_fallthru
        _
      // Predicated region
      $region17: #{ec_cut_forward.1} parent=11 // pred_check
        %p237 = pneg %p109
      $region18: #{ec_cut_forward.1} parent=11 // pred_check_branch
        %239 = sbr.rel (%p237) target = $region20
      $region19: #{ec_cut_forward.1} parent=11 // pred_region
        _
      $region20: #{ec_cut_forward.1} parent=11 // pred_fallthru
        _
      // Predicated region
      $region21: #{ec_cut_forward.1} parent=11 // pred_check
        %p240 = pneg %p130
      $region22: #{ec_cut_forward.1} parent=11 // pred_check_branch
        %242 = sbr.rel (%p240) target = $region24
      $region23: #{ec_cut_forward.1} parent=11 // pred_region
        _
      $region24: #{ec_cut_forward.1} parent=11 // pred_fallthru
        _
      // Predicated region
      $region25: #{ec_cut_forward.1} parent=11 // pred_check
        %p243 = pneg %p151
      $region26: #{ec_cut_forward.1} parent=11 // pred_check_branch
        %245 = sbr.rel (%p243) target = $region28
      $region27: #{ec_cut_forward.1} parent=11 // pred_region
        _
      $region28: #{ec_cut_forward.1} parent=11 // pred_fallthru
        _
      // Predicated region
      $region29: #{ec_cut_forward.1} parent=11 // pred_check
        %p246 = pneg %p172
      $region30: #{ec_cut_forward.1} parent=11 // pred_check_branch
        %248 = sbr.rel (%p246) target = $region32
      $region31: #{ec_cut_forward.1} parent=11 // pred_region
        _
      $region32: #{ec_cut_forward.1} parent=11 // pred_fallthru
        _
      // Predicated region
      $region33: #{ec_cut_forward.1} parent=11 // pred_check
        %p249 = pneg %p193
      $region34: #{ec_cut_forward.1} parent=11 // pred_check_branch
        %251 = sbr.rel (%p249) target = $region36
      $region35: #{ec_cut_forward.1} parent=11 // pred_region
        _
      $region36: #{ec_cut_forward.1} parent=11 // pred_fallthru
        _
    $region12: #{ec_cut_forward.1} parent=5 // pred_fallthru
      _
    %p252 = scmp.lt.s32.totalorder %s15, 2
    // Predicated region
    $region37: #{ec_cut_forward.1} parent=5 // pred_check
      %p253 = pneg %p252
    $region38: #{ec_cut_forward.1} parent=5 // pred_check_branch
      %255 = sbr.rel (%p253) target = $region40
    $region39: #{ec_cut_forward.1} parent=5 // pred_region
      // Predicated region
      $region41: #{ec_cut_forward.1} parent=39 // pred_check
        %p256 = pneg %p35
      $region42: #{ec_cut_forward.1} parent=39 // pred_check_branch
        %258 = sbr.rel (%p256) target = $region44
      $region43: #{ec_cut_forward.1} parent=39 // pred_region
        %s259 = smul.u32 4, %s15
        %p260 = scmp.lt.s32.totalorder %s259, 7
        %s261 = scalar_select %p260, %s259, 7
        %s262 = smul.addr %s261, 2
        %s263 = scalar_lea.vmem %s0, %s262
        %s264 = smul.u32 4, %s15
      $region44: #{ec_cut_forward.1} parent=39 // pred_fallthru
        _
      // Predicated region
      $region45: #{ec_cut_forward.1} parent=39 // pred_check
        %p265 = pneg %p61
      $region46: #{ec_cut_forward.1} parent=39 // pred_check_branch
        %267 = sbr.rel (%p265) target = $region48
      $region47: #{ec_cut_forward.1} parent=39 // pred_region
        %s268 = smul.u32 4, %s15
        %p269 = scmp.lt.s32.totalorder %s268, 7
        %s270 = scalar_select %p269, %s268, 7
        %s271 = smul.addr %s270, 2
        %s272 = scalar_lea.vmem %s1, %s271
        %s273 = smul.u32 4, %s15
      $region48: #{ec_cut_forward.1} parent=39 // pred_fallthru
        _
    $region40: #{ec_cut_forward.1} parent=5 // pred_fallthru
      _
    %p274 = scmp.le.s32.totalorder 1, %s15
    %p275 = scmp.lt.s32.totalorder %s15, 3
    %p276 = pnand %p274, %p275
    %p277 = pneg %p276
    // Predicated region
    $region49: #{ec_cut_forward.1} parent=5 // pred_check
      _
    $region50: #{ec_cut_forward.1} parent=5 // pred_check_branch
      %279 = sbr.rel (%p276) target = $region52
    $region51: #{ec_cut_forward.1} parent=5 // pred_region
      %s280 = ssub.s32 %s15, 1
      %s281 = smul.u32 4, %s20
      %p282 = scmp.lt.s32.totalorder %s281, 7
      %s283 = scalar_select %p282, %s281, 7
      %s284 = smul.addr %s283, 2
      %s285 = scalar_lea.vmem %s0, %s284
      %p286 = pneg %p41
      %p287 = pneg %p38
      %s288 = smul.u32 4, %s20
      %p289 = scmp.lt.s32.totalorder %s288, 7
      %s290 = scalar_select %p289, %s288, 7
      %s291 = smul.addr %s290, 2
      %s292 = scalar_lea.vmem %s1, %s291
      %p293 = pneg %p67
      %p294 = pneg %p64
      %p295 = pneg %p88
      %p296 = pneg %p85
      %p297 = pneg %p109
      %p298 = pneg %p106
      %p299 = pneg %p130
      %p300 = pneg %p127
      %p301 = pneg %p151
      %p302 = pneg %p148
      %p303 = pneg %p172
      %p304 = pneg %p169
      %p305 = pneg %p193
      %p306 = pneg %p190
      %p307 = pneg %p219
      %p308 = pneg %p216
      %s309 = smul.u32 4, %s20
      %p310 = scmp.lt.s32.totalorder %s309, 7
      %s311 = scalar_select %p310, %s309, 7
      %s312 = scalar_lea.vmem %s8, %s311
      %s313 = smul.u32 4, %s20
      %p314 = scmp.lt.s32.totalorder %s313, 7
      %s315 = scalar_select %p314, %s313, 7
      %s316 = smul.addr %s315, 2
      %s317 = scalar_lea.vmem %s0, %s316
      %s318 = smul.u32 4, %s20
      %s319 = smul.u32 4, %s20
      %p320 = scmp.lt.s32.totalorder %s319, 7
      %s321 = scalar_select %p320, %s319, 7
      %s322 = smul.addr %s321, 2
      %s323 = scalar_lea.vmem %s1, %s322
      %s324 = smul.u32 4, %s20
      %s325 = smul.u32 4, %s20
      %p326 = scmp.lt.s32.totalorder %s325, 7
      %s327 = scalar_select %p326, %s325, 7
      %s328 = scalar_lea.vmem %s8, %s327
      %s329 = smul.u32 4, %s20
      %v331 = vld [vmem:[%s317] ss:$2 sm:$0xf]
      %s332 = scalar_lea.vmem %s317, 1
      %v333 = vld [vmem:[%s332] ss:$2 sm:$0xf]
      %v334 = vlaneseq
      %v335 = vshrl.u32 %v334, 7
      %v336 = vadd.s32 %v335, 8
      %v337 = vadd.s32 %v335, 16
      %v338 = vadd.s32 %v335, 24
      %v339 = vadd.s32 %v335, 32
      %v340 = vadd.s32 %v335, 40
      %v341 = vadd.s32 %v335, 48
      %v342 = vadd.s32 %v335, 56
      %v343 = vperm.slane %v331, 0
      %v344 = vperm.slane %v331, 1
      %v345 = vperm.slane %v331, 2
      %v346 = vperm.slane %v331, 3
      %vm347 = vcmp.eq.s32.totalorder %v335, %v343
      %vm348 = vcmp.eq.s32.totalorder %v335, %v344
      %vm349 = vcmp.eq.s32.totalorder %v335, %v345
      %vm350 = vcmp.eq.s32.totalorder %v335, %v346
      %vm351 = vcmp.eq.s32.totalorder %v336, %v343
      %vm352 = vcmp.eq.s32.totalorder %v336, %v344
      %vm353 = vcmp.eq.s32.totalorder %v336, %v345
      %vm354 = vcmp.eq.s32.totalorder %v336, %v346
      %vm355 = vcmp.eq.s32.totalorder %v337, %v343
      %vm356 = vcmp.eq.s32.totalorder %v337, %v344
      %vm357 = vcmp.eq.s32.totalorder %v337, %v345
      %vm358 = vcmp.eq.s32.totalorder %v337, %v346
      %vm359 = vcmp.eq.s32.totalorder %v338, %v343
      %vm360 = vcmp.eq.s32.totalorder %v338, %v344
      %vm361 = vcmp.eq.s32.totalorder %v338, %v345
      %vm362 = vcmp.eq.s32.totalorder %v338, %v346
      %vm363 = vcmp.eq.s32.totalorder %v339, %v343
      %vm364 = vcmp.eq.s32.totalorder %v339, %v344
      %vm365 = vcmp.eq.s32.totalorder %v339, %v345
      %vm366 = vcmp.eq.s32.totalorder %v339, %v346
      %vm367 = vcmp.eq.s32.totalorder %v340, %v343
      %vm368 = vcmp.eq.s32.totalorder %v340, %v344
      %vm369 = vcmp.eq.s32.totalorder %v340, %v345
      %vm370 = vcmp.eq.s32.totalorder %v340, %v346
      %vm371 = vcmp.eq.s32.totalorder %v341, %v343
      %vm372 = vcmp.eq.s32.totalorder %v341, %v344
      %vm373 = vcmp.eq.s32.totalorder %v341, %v345
      %vm374 = vcmp.eq.s32.totalorder %v341, %v346
      %vm375 = vcmp.eq.s32.totalorder %v342, %v343
      %vm376 = vcmp.eq.s32.totalorder %v342, %v344
      %vm377 = vcmp.eq.s32.totalorder %v342, %v345
      %vm378 = vcmp.eq.s32.totalorder %v342, %v346
      %v379 = vsel %vm347, 1, 0
      %v380 = vsel %vm348, 1, 0
      %v381 = vsel %vm349, 1, 0
      %v382 = vsel %vm350, 1, 0
      %v383 = vsel %vm351, 1, 0
      %v384 = vsel %vm352, 1, 0
      %v385 = vsel %vm353, 1, 0
      %v386 = vsel %vm354, 1, 0
      %v387 = vsel %vm355, 1, 0
      %v388 = vsel %vm356, 1, 0
      %v389 = vsel %vm357, 1, 0
      %v390 = vsel %vm358, 1, 0
      %v391 = vsel %vm359, 1, 0
      %v392 = vsel %vm360, 1, 0
      %v393 = vsel %vm361, 1, 0
      %v394 = vsel %vm362, 1, 0
      %v395 = vsel %vm363, 1, 0
      %v396 = vsel %vm364, 1, 0
      %v397 = vsel %vm365, 1, 0
      %v398 = vsel %vm366, 1, 0
      %v399 = vsel %vm367, 1, 0
      %v400 = vsel %vm368, 1, 0
      %v401 = vsel %vm369, 1, 0
      %v402 = vsel %vm370, 1, 0
      %v403 = vsel %vm371, 1, 0
      %v404 = vsel %vm372, 1, 0
      %v405 = vsel %vm373, 1, 0
      %v406 = vsel %vm374, 1, 0
      %v407 = vsel %vm375, 1, 0
      %v408 = vsel %vm376, 1, 0
      %v409 = vsel %vm377, 1, 0
      %v410 = vsel %vm378, 1, 0
      %v411 = vcvt.s32.f32 %v379
      %v412 = vcvt.s32.f32 %v380
      %v413 = vcvt.s32.f32 %v381
      %v414 = vcvt.s32.f32 %v382
      %v415 = vcvt.s32.f32 %v383
      %v416 = vcvt.s32.f32 %v384
      %v417 = vcvt.s32.f32 %v385
      %v418 = vcvt.s32.f32 %v386
      %v419 = vcvt.s32.f32 %v387
      %v420 = vcvt.s32.f32 %v388
      %v421 = vcvt.s32.f32 %v389
      %v422 = vcvt.s32.f32 %v390
      %v423 = vcvt.s32.f32 %v391
      %v424 = vcvt.s32.f32 %v392
      %v425 = vcvt.s32.f32 %v393
      %v426 = vcvt.s32.f32 %v394
      %v427 = vcvt.s32.f32 %v395
      %v428 = vcvt.s32.f32 %v396
      %v429 = vcvt.s32.f32 %v397
      %v430 = vcvt.s32.f32 %v398
      %v431 = vcvt.s32.f32 %v399
      %v432 = vcvt.s32.f32 %v400
      %v433 = vcvt.s32.f32 %v401
      %v434 = vcvt.s32.f32 %v402
      %v435 = vcvt.s32.f32 %v403
      %v436 = vcvt.s32.f32 %v404
      %v437 = vcvt.s32.f32 %v405
      %v438 = vcvt.s32.f32 %v406
      %v439 = vcvt.s32.f32 %v407
      %v440 = vcvt.s32.f32 %v408
      %v441 = vcvt.s32.f32 %v409
      %v442 = vcvt.s32.f32 %v410
      %v443 = vperm.slane %v333, 0
      %v444 = vperm.slane %v333, 1
      %v445 = vperm.slane %v333, 2
      %v446 = vperm.slane %v333, 3
      %vm447 = vcmp.eq.s32.totalorder %v335, %v443
      %vm448 = vcmp.eq.s32.totalorder %v335, %v444
      %vm449 = vcmp.eq.s32.totalorder %v335, %v445
      %vm450 = vcmp.eq.s32.totalorder %v335, %v446
      %vm451 = vcmp.eq.s32.totalorder %v336, %v443
      %vm452 = vcmp.eq.s32.totalorder %v336, %v444
      %vm453 = vcmp.eq.s32.totalorder %v336, %v445
      %vm454 = vcmp.eq.s32.totalorder %v336, %v446
      %vm455 = vcmp.eq.s32.totalorder %v337, %v443
      %vm456 = vcmp.eq.s32.totalorder %v337, %v444
      %vm457 = vcmp.eq.s32.totalorder %v337, %v445
      %vm458 = vcmp.eq.s32.totalorder %v337, %v446
      %vm459 = vcmp.eq.s32.totalorder %v338, %v443
      %vm460 = vcmp.eq.s32.totalorder %v338, %v444
      %vm461 = vcmp.eq.s32.totalorder %v338, %v445
      %vm462 = vcmp.eq.s32.totalorder %v338, %v446
      %vm463 = vcmp.eq.s32.totalorder %v339, %v443
      %vm464 = vcmp.eq.s32.totalorder %v339, %v444
      %vm465 = vcmp.eq.s32.totalorder %v339, %v445
      %vm466 = vcmp.eq.s32.totalorder %v339, %v446
      %vm467 = vcmp.eq.s32.totalorder %v340, %v443
      %vm468 = vcmp.eq.s32.totalorder %v340, %v444
      %vm469 = vcmp.eq.s32.totalorder %v340, %v445
      %vm470 = vcmp.eq.s32.totalorder %v340, %v446
      %vm471 = vcmp.eq.s32.totalorder %v341, %v443
      %vm472 = vcmp.eq.s32.totalorder %v341, %v444
      %vm473 = vcmp.eq.s32.totalorder %v341, %v445
      %vm474 = vcmp.eq.s32.totalorder %v341, %v446
      %vm475 = vcmp.eq.s32.totalorder %v342, %v443
      %vm476 = vcmp.eq.s32.totalorder %v342, %v444
      %vm477 = vcmp.eq.s32.totalorder %v342, %v445
      %vm478 = vcmp.eq.s32.totalorder %v342, %v446
      %v479 = vsel %vm447, 1, 0
      %v480 = vsel %vm448, 1, 0
      %v481 = vsel %vm449, 1, 0
      %v482 = vsel %vm450, 1, 0
      %v483 = vsel %vm451, 1, 0
      %v484 = vsel %vm452, 1, 0
      %v485 = vsel %vm453, 1, 0
      %v486 = vsel %vm454, 1, 0
      %v487 = vsel %vm455, 1, 0
      %v488 = vsel %vm456, 1, 0
      %v489 = vsel %vm457, 1, 0
      %v490 = vsel %vm458, 1, 0
      %v491 = vsel %vm459, 1, 0
      %v492 = vsel %vm460, 1, 0
      %v493 = vsel %vm461, 1, 0
      %v494 = vsel %vm462, 1, 0
      %v495 = vsel %vm463, 1, 0
      %v496 = vsel %vm464, 1, 0
      %v497 = vsel %vm465, 1, 0
      %v498 = vsel %vm466, 1, 0
      %v499 = vsel %vm467, 1, 0
      %v500 = vsel %vm468, 1, 0
      %v501 = vsel %vm469, 1, 0
      %v502 = vsel %vm470, 1, 0
      %v503 = vsel %vm471, 1, 0
      %v504 = vsel %vm472, 1, 0
      %v505 = vsel %vm473, 1, 0
      %v506 = vsel %vm474, 1, 0
      %v507 = vsel %vm475, 1, 0
      %v508 = vsel %vm476, 1, 0
      %v509 = vsel %vm477, 1, 0
      %v510 = vsel %vm478, 1, 0
      %v511 = vcvt.s32.f32 %v479
      %v512 = vcvt.s32.f32 %v480
      %v513 = vcvt.s32.f32 %v481
      %v514 = vcvt.s32.f32 %v482
      %v515 = vcvt.s32.f32 %v483
      %v516 = vcvt.s32.f32 %v484
      %v517 = vcvt.s32.f32 %v485
      %v518 = vcvt.s32.f32 %v486
      %v519 = vcvt.s32.f32 %v487
      %v520 = vcvt.s32.f32 %v488
      %v521 = vcvt.s32.f32 %v489
      %v522 = vcvt.s32.f32 %v490
      %v523 = vcvt.s32.f32 %v491
      %v524 = vcvt.s32.f32 %v492
      %v525 = vcvt.s32.f32 %v493
      %v526 = vcvt.s32.f32 %v494
      %v527 = vcvt.s32.f32 %v495
      %v528 = vcvt.s32.f32 %v496
      %v529 = vcvt.s32.f32 %v497
      %v530 = vcvt.s32.f32 %v498
      %v531 = vcvt.s32.f32 %v499
      %v532 = vcvt.s32.f32 %v500
      %v533 = vcvt.s32.f32 %v501
      %v534 = vcvt.s32.f32 %v502
      %v535 = vcvt.s32.f32 %v503
      %v536 = vcvt.s32.f32 %v504
      %v537 = vcvt.s32.f32 %v505
      %v538 = vcvt.s32.f32 %v506
      %v539 = vcvt.s32.f32 %v507
      %v540 = vcvt.s32.f32 %v508
      %v541 = vcvt.s32.f32 %v509
      %v542 = vcvt.s32.f32 %v510
      %v543 = vld [vmem:[%s2] sm:$0xff]
      %v544 = vld [vmem:[%s2 + $0x8] sm:$0xff]
      %v545 = vld [vmem:[%s2 + $0x10] sm:$0xff]
      %v546 = vld [vmem:[%s2 + $0x18] sm:$0xff]
      %v547 = vld [vmem:[%s3] sm:$0xff]
      %v548 = vld [vmem:[%s3 + $0x8] sm:$0xff]
      %v549 = vld [vmem:[%s3 + $0x10] sm:$0xff]
      %v550 = vld [vmem:[%s3 + $0x18] sm:$0xff]
      %vm551 = vcmask 523264
      %v553 = vsel %vm551, %v547, 0
      %v556 = vsel %vm551, %v548, 0
      %v559 = vsel %vm551, %v549, 0
      %v562 = vsel %vm551, %v550, 0
      %564 = vmatpush.msra.mxu0 0.0
      %565 = vmatpush.msra.mxu0 0.0
      %566 = vmatpush.msra.mxu0 0.0
      %567 = vmatpush.msra.mxu0 0.0
      %568 = vmatpush.msra.mxu0 0.0
      %569 = vmatpush.msra.mxu0 0.0
      %570 = vmatpush.msra.mxu0 0.0
      %571 = vmatpush.msra.mxu0 0.0
      %572 = vmatpush.msra.mxu0 %v539
      %573 = vmatpush.msra.mxu0 %v535
      %574 = vmatpush.msra.mxu0 %v531
      %575 = vmatpush.msra.mxu0 %v527
      %576 = vmatpush.msra.mxu0 %v523
      %577 = vmatpush.msra.mxu0 %v519
      %578 = vmatpush.msra.mxu0 %v515
      %579 = vmatpush.msra.mxu0 %v511
      %580 = vmatmul.f32.gmra.mxu0 %v553
      %v581 = vpop.f32.mrf.mxu0
      %v582 = vadd.f32 0.0, %v581
      %583 = vmatmul.f32.gmra.mxu0 %v556
      %v584 = vpop.f32.mrf.mxu0
      %v585 = vadd.f32 0.0, %v584
      %586 = vmatmul.f32.gmra.mxu0 %v559
      %v587 = vpop.f32.mrf.mxu0
      %v588 = vadd.f32 0.0, %v587
      %589 = vmatmul.f32.gmra.mxu0 %v562
      %v590 = vpop.f32.mrf.mxu0
      %v591 = vadd.f32 0.0, %v590
      %592 = vdwg.mxu0
      %593 = vmatpush.msra.mxu0 0.0
      %594 = vmatpush.msra.mxu0 0.0
      %595 = vmatpush.msra.mxu0 0.0
      %596 = vmatpush.msra.mxu0 0.0
      %597 = vmatpush.msra.mxu0 0.0
      %598 = vmatpush.msra.mxu0 0.0
      %599 = vmatpush.msra.mxu0 0.0
      %600 = vmatpush.msra.mxu0 0.0
      %601 = vmatpush.msra.mxu0 %v540
      %602 = vmatpush.msra.mxu0 %v536
      %603 = vmatpush.msra.mxu0 %v532
      %604 = vmatpush.msra.mxu0 %v528
      %605 = vmatpush.msra.mxu0 %v524
      %606 = vmatpush.msra.mxu0 %v520
      %607 = vmatpush.msra.mxu0 %v516
      %608 = vmatpush.msra.mxu0 %v512
      %609 = vmatmul.f32.gmra.mxu0 %v553
      %v610 = vpop.f32.mrf.mxu0
      %v611 = vadd.f32 0.0, %v610
      %612 = vmatmul.f32.gmra.mxu0 %v556
      %v613 = vpop.f32.mrf.mxu0
      %v614 = vadd.f32 0.0, %v613
      %615 = vmatmul.f32.gmra.mxu0 %v559
      %v616 = vpop.f32.mrf.mxu0
      %v617 = vadd.f32 0.0, %v616
      %618 = vmatmul.f32.gmra.mxu0 %v562
      %v619 = vpop.f32.mrf.mxu0
      %v620 = vadd.f32 0.0, %v619
      %621 = vdwg.mxu0
      %622 = vmatpush.msra.mxu0 0.0
      %623 = vmatpush.msra.mxu0 0.0
      %624 = vmatpush.msra.mxu0 0.0
      %625 = vmatpush.msra.mxu0 0.0
      %626 = vmatpush.msra.mxu0 0.0
      %627 = vmatpush.msra.mxu0 0.0
      %628 = vmatpush.msra.mxu0 0.0
      %629 = vmatpush.msra.mxu0 0.0
      %630 = vmatpush.msra.mxu0 %v541
      %631 = vmatpush.msra.mxu0 %v537
      %632 = vmatpush.msra.mxu0 %v533
      %633 = vmatpush.msra.mxu0 %v529
      %634 = vmatpush.msra.mxu0 %v525
      %635 = vmatpush.msra.mxu0 %v521
      %636 = vmatpush.msra.mxu0 %v517
      %637 = vmatpush.msra.mxu0 %v513
      %638 = vmatmul.f32.gmra.mxu0 %v553
      %v639 = vpop.f32.mrf.mxu0
      %v640 = vadd.f32 0.0, %v639
      %641 = vmatmul.f32.gmra.mxu0 %v556
      %v642 = vpop.f32.mrf.mxu0
      %v643 = vadd.f32 0.0, %v642
      %644 = vmatmul.f32.gmra.mxu0 %v559
      %v645 = vpop.f32.mrf.mxu0
      %v646 = vadd.f32 0.0, %v645
      %647 = vmatmul.f32.gmra.mxu0 %v562
      %v648 = vpop.f32.mrf.mxu0
      %v649 = vadd.f32 0.0, %v648
      %650 = vdwg.mxu0
      %651 = vmatpush.msra.mxu0 0.0
      %652 = vmatpush.msra.mxu0 0.0
      %653 = vmatpush.msra.mxu0 0.0
      %654 = vmatpush.msra.mxu0 0.0
      %655 = vmatpush.msra.mxu0 0.0
      %656 = vmatpush.msra.mxu0 0.0
      %657 = vmatpush.msra.mxu0 0.0
      %658 = vmatpush.msra.mxu0 0.0
      %659 = vmatpush.msra.mxu0 %v542
      %660 = vmatpush.msra.mxu0 %v538
      %661 = vmatpush.msra.mxu0 %v534
      %662 = vmatpush.msra.mxu0 %v530
      %663 = vmatpush.msra.mxu0 %v526
      %664 = vmatpush.msra.mxu0 %v522
      %665 = vmatpush.msra.mxu0 %v518
      %666 = vmatpush.msra.mxu0 %v514
      %667 = vmatmul.f32.gmra.mxu0 %v553
      %v668 = vpop.f32.mrf.mxu0
      %v669 = vadd.f32 0.0, %v668
      %670 = vmatmul.f32.gmra.mxu0 %v556
      %v671 = vpop.f32.mrf.mxu0
      %v672 = vadd.f32 0.0, %v671
      %673 = vmatmul.f32.gmra.mxu0 %v559
      %v674 = vpop.f32.mrf.mxu0
      %v675 = vadd.f32 0.0, %v674
      %676 = vmatmul.f32.gmra.mxu0 %v562
      %v677 = vpop.f32.mrf.mxu0
      %v678 = vadd.f32 0.0, %v677
      %679 = vdwg.mxu0
      %v681 = vsel %vm551, %v543, 0
      %v684 = vsel %vm551, %v544, 0
      %v687 = vsel %vm551, %v545, 0
      %v690 = vsel %vm551, %v546, 0
      %692 = vmatpush.msra.mxu0 0.0
      %693 = vmatpush.msra.mxu0 0.0
      %694 = vmatpush.msra.mxu0 0.0
      %695 = vmatpush.msra.mxu0 0.0
      %696 = vmatpush.msra.mxu0 0.0
      %697 = vmatpush.msra.mxu0 0.0
      %698 = vmatpush.msra.mxu0 0.0
      %699 = vmatpush.msra.mxu0 0.0
      %700 = vmatpush.msra.mxu0 %v439
      %701 = vmatpush.msra.mxu0 %v435
      %702 = vmatpush.msra.mxu0 %v431
      %703 = vmatpush.msra.mxu0 %v427
      %704 = vmatpush.msra.mxu0 %v423
      %705 = vmatpush.msra.mxu0 %v419
      %706 = vmatpush.msra.mxu0 %v415
      %707 = vmatpush.msra.mxu0 %v411
      %708 = vmatmul.f32.gmra.mxu0 %v681
      %v709 = vpop.f32.mrf.mxu0
      %v710 = vadd.f32 %v582, %v709
      %711 = vmatmul.f32.gmra.mxu0 %v684
      %v712 = vpop.f32.mrf.mxu0
      %v713 = vadd.f32 %v585, %v712
      %714 = vmatmul.f32.gmra.mxu0 %v687
      %v715 = vpop.f32.mrf.mxu0
      %v716 = vadd.f32 %v588, %v715
      %717 = vmatmul.f32.gmra.mxu0 %v690
      %v718 = vpop.f32.mrf.mxu0
      %v719 = vadd.f32 %v591, %v718
      %720 = vdwg.mxu0
      %721 = vmatpush.msra.mxu0 0.0
      %722 = vmatpush.msra.mxu0 0.0
      %723 = vmatpush.msra.mxu0 0.0
      %724 = vmatpush.msra.mxu0 0.0
      %725 = vmatpush.msra.mxu0 0.0
      %726 = vmatpush.msra.mxu0 0.0
      %727 = vmatpush.msra.mxu0 0.0
      %728 = vmatpush.msra.mxu0 0.0
      %729 = vmatpush.msra.mxu0 %v440
      %730 = vmatpush.msra.mxu0 %v436
      %731 = vmatpush.msra.mxu0 %v432
      %732 = vmatpush.msra.mxu0 %v428
      %733 = vmatpush.msra.mxu0 %v424
      %734 = vmatpush.msra.mxu0 %v420
      %735 = vmatpush.msra.mxu0 %v416
      %736 = vmatpush.msra.mxu0 %v412
      %737 = vmatmul.f32.gmra.mxu0 %v681
      %v738 = vpop.f32.mrf.mxu0
      %v739 = vadd.f32 %v611, %v738
      %740 = vmatmul.f32.gmra.mxu0 %v684
      %v741 = vpop.f32.mrf.mxu0
      %v742 = vadd.f32 %v614, %v741
      %743 = vmatmul.f32.gmra.mxu0 %v687
      %v744 = vpop.f32.mrf.mxu0
      %v745 = vadd.f32 %v617, %v744
      %746 = vmatmul.f32.gmra.mxu0 %v690
      %v747 = vpop.f32.mrf.mxu0
      %v748 = vadd.f32 %v620, %v747
      %749 = vdwg.mxu0
      %750 = vmatpush.msra.mxu0 0.0
      %751 = vmatpush.msra.mxu0 0.0
      %752 = vmatpush.msra.mxu0 0.0
      %753 = vmatpush.msra.mxu0 0.0
      %754 = vmatpush.msra.mxu0 0.0
      %755 = vmatpush.msra.mxu0 0.0
      %756 = vmatpush.msra.mxu0 0.0
      %757 = vmatpush.msra.mxu0 0.0
      %758 = vmatpush.msra.mxu0 %v441
      %759 = vmatpush.msra.mxu0 %v437
      %760 = vmatpush.msra.mxu0 %v433
      %761 = vmatpush.msra.mxu0 %v429
      %762 = vmatpush.msra.mxu0 %v425
      %763 = vmatpush.msra.mxu0 %v421
      %764 = vmatpush.msra.mxu0 %v417
      %765 = vmatpush.msra.mxu0 %v413
      %766 = vmatmul.f32.gmra.mxu0 %v681
      %v767 = vpop.f32.mrf.mxu0
      %v768 = vadd.f32 %v640, %v767
      %769 = vmatmul.f32.gmra.mxu0 %v684
      %v770 = vpop.f32.mrf.mxu0
      %v771 = vadd.f32 %v643, %v770
      %772 = vmatmul.f32.gmra.mxu0 %v687
      %v773 = vpop.f32.mrf.mxu0
      %v774 = vadd.f32 %v646, %v773
      %775 = vmatmul.f32.gmra.mxu0 %v690
      %v776 = vpop.f32.mrf.mxu0
      %v777 = vadd.f32 %v649, %v776
      %778 = vdwg.mxu0
      %779 = vmatpush.msra.mxu0 0.0
      %780 = vmatpush.msra.mxu0 0.0
      %781 = vmatpush.msra.mxu0 0.0
      %782 = vmatpush.msra.mxu0 0.0
      %783 = vmatpush.msra.mxu0 0.0
      %784 = vmatpush.msra.mxu0 0.0
      %785 = vmatpush.msra.mxu0 0.0
      %786 = vmatpush.msra.mxu0 0.0
      %787 = vmatpush.msra.mxu0 %v442
      %788 = vmatpush.msra.mxu0 %v438
      %789 = vmatpush.msra.mxu0 %v434
      %790 = vmatpush.msra.mxu0 %v430
      %791 = vmatpush.msra.mxu0 %v426
      %792 = vmatpush.msra.mxu0 %v422
      %793 = vmatpush.msra.mxu0 %v418
      %794 = vmatpush.msra.mxu0 %v414
      %795 = vmatmul.f32.gmra.mxu0 %v681
      %v796 = vpop.f32.mrf.mxu0
      %v797 = vadd.f32 %v669, %v796
      %798 = vmatmul.f32.gmra.mxu0 %v684
      %v799 = vpop.f32.mrf.mxu0
      %v800 = vadd.f32 %v672, %v799
      %801 = vmatmul.f32.gmra.mxu0 %v687
      %v802 = vpop.f32.mrf.mxu0
      %v803 = vadd.f32 %v675, %v802
      %804 = vmatmul.f32.gmra.mxu0 %v690
      %v805 = vpop.f32.mrf.mxu0
      %v806 = vadd.f32 %v678, %v805
      %807 = vdwg.mxu0
      %v808 = vld [vmem:[%s4] sm:$0xf]
      %v809 = vld [vmem:[%s4 + $0x4] sm:$0xf]
      %v810 = vld [vmem:[%s4 + $0x8] sm:$0xf]
      %v811 = vld [vmem:[%s4 + $0xc] sm:$0xf]
      %v812 = vld [vmem:[%s323] sm:$0xff]
      %v817 = vunpack.c.l.b16 %v808
      %v818 = vunpack.c.l.b16 %v809
      %v819 = vunpack.c.l.b16 %v810
      %v820 = vunpack.c.l.b16 %v811
      %v821 = vpack.c.b16 %v818, %v817
      %v822 = vpack.c.b16 %v820, %v819
      %824 = vst [vmem:[#allocation1] ss:$4 sm:$0xff] %v812
      %v825 = vld.sshfl [vmem:[#allocation1] sm:$0xff pattern:$0x73625140]
      %v826 = vld.sshfl [vmem:[#allocation1 + $0x8] sm:$0xff pattern:$0x73625140]
      %v827 = vld.sshfl [vmem:[#allocation1 + $0x10] sm:$0xff pattern:$0x73625140]
      %v828 = vld.sshfl [vmem:[#allocation1 + $0x18] sm:$0xff pattern:$0x73625140]
      %vm829 = vcmask 31744
      %v831 = vsel %vm829, %v821, 0
      %v834 = vsel %vm829, %v822, 0
      %vm836 = vcmask 1041408
      %v837 = vsel %vm836, %v825, 0
      %v839 = vsel %vm836, %v826, 0
      %v841 = vsel %vm836, %v827, 0
      %v843 = vsel %vm836, %v828, 0
      %845 = vmatpush.bf16.msra.mxu0 0
      %846 = vmatpush.bf16.msra.mxu0 0
      %847 = vmatpush.bf16.msra.mxu0 0
      %848 = vmatpush.bf16.msra.mxu0 0
      %849 = vmatpush.bf16.msra.mxu0 0
      %850 = vmatpush.bf16.msra.mxu0 0
      %851 = vmatpush.bf16.msra.mxu0 0
      %852 = vmatpush.bf16.msra.mxu0 %v837
      %853 = vmatmul.bf16.gmra.mxu0 %v831
      %v854 = vpop.f32.mrf.mxu0
      %v855 = vadd.f32 0.0, %v854
      %v856 = vpop.f32.mrf.mxu0
      %v857 = vadd.f32 0.0, %v856
      %858 = vmatmul.bf16.gmra.mxu0 %v834
      %v859 = vpop.f32.mrf.mxu0
      %v860 = vadd.f32 0.0, %v859
      %v861 = vpop.f32.mrf.mxu0
      %v862 = vadd.f32 0.0, %v861
      %863 = vdwg.mxu0
      %864 = vmatpush.bf16.msra.mxu0 0
      %865 = vmatpush.bf16.msra.mxu0 0
      %866 = vmatpush.bf16.msra.mxu0 0
      %867 = vmatpush.bf16.msra.mxu0 0
      %868 = vmatpush.bf16.msra.mxu0 0
      %869 = vmatpush.bf16.msra.mxu0 0
      %870 = vmatpush.bf16.msra.mxu0 0
      %871 = vmatpush.bf16.msra.mxu0 %v839
      %872 = vmatmul.bf16.gmra.mxu0 %v831
      %v873 = vpop.f32.mrf.mxu0
      %v874 = vadd.f32 0.0, %v873
      %v875 = vpop.f32.mrf.mxu0
      %v876 = vadd.f32 0.0, %v875
      %877 = vmatmul.bf16.gmra.mxu0 %v834
      %v878 = vpop.f32.mrf.mxu0
      %v879 = vadd.f32 0.0, %v878
      %v880 = vpop.f32.mrf.mxu0
      %v881 = vadd.f32 0.0, %v880
      %882 = vdwg.mxu0
      %883 = vmatpush.bf16.msra.mxu0 0
      %884 = vmatpush.bf16.msra.mxu0 0
      %885 = vmatpush.bf16.msra.mxu0 0
      %886 = vmatpush.bf16.msra.mxu0 0
      %887 = vmatpush.bf16.msra.mxu0 0
      %888 = vmatpush.bf16.msra.mxu0 0
      %889 = vmatpush.bf16.msra.mxu0 0
      %890 = vmatpush.bf16.msra.mxu0 %v841
      %891 = vmatmul.bf16.gmra.mxu0 %v831
      %v892 = vpop.f32.mrf.mxu0
      %v893 = vadd.f32 0.0, %v892
      %v894 = vpop.f32.mrf.mxu0
      %v895 = vadd.f32 0.0, %v894
      %896 = vmatmul.bf16.gmra.mxu0 %v834
      %v897 = vpop.f32.mrf.mxu0
      %v898 = vadd.f32 0.0, %v897
      %v899 = vpop.f32.mrf.mxu0
      %v900 = vadd.f32 0.0, %v899
      %901 = vdwg.mxu0
      %902 = vmatpush.bf16.msra.mxu0 0
      %903 = vmatpush.bf16.msra.mxu0 0
      %904 = vmatpush.bf16.msra.mxu0 0
      %905 = vmatpush.bf16.msra.mxu0 0
      %906 = vmatpush.bf16.msra.mxu0 0
      %907 = vmatpush.bf16.msra.mxu0 0
      %908 = vmatpush.bf16.msra.mxu0 0
      %909 = vmatpush.bf16.msra.mxu0 %v843
      %910 = vmatmul.bf16.gmra.mxu0 %v831
      %v911 = vpop.f32.mrf.mxu0
      %v912 = vadd.f32 0.0, %v911
      %v913 = vpop.f32.mrf.mxu0
      %v914 = vadd.f32 0.0, %v913
      %915 = vmatmul.bf16.gmra.mxu0 %v834
      %v916 = vpop.f32.mrf.mxu0
      %v917 = vadd.f32 0.0, %v916
      %v918 = vpop.f32.mrf.mxu0
      %v919 = vadd.f32 0.0, %v918
      %920 = vdwg.mxu0
      %v921 = vadd.f32 %v710, %v855
      %v922 = vadd.f32 %v739, %v874
      %v923 = vadd.f32 %v768, %v893
      %v924 = vadd.f32 %v797, %v912
      %v925 = vadd.f32 %v713, %v857
      %v926 = vadd.f32 %v742, %v876
      %v927 = vadd.f32 %v771, %v895
      %v928 = vadd.f32 %v800, %v914
      %v929 = vadd.f32 %v716, %v860
      %v930 = vadd.f32 %v745, %v879
      %v931 = vadd.f32 %v774, %v898
      %v932 = vadd.f32 %v803, %v917
      %v933 = vadd.f32 %v719, %v862
      %v934 = vadd.f32 %v748, %v881
      %v935 = vadd.f32 %v777, %v900
      %v936 = vadd.f32 %v806, %v919
      %v937 = vld [vmem:[%s5] sm:$0xff]
      %v938 = vld [vmem:[%s5 + $0x8] sm:$0xff]
      %v939 = vld [vmem:[%s5 + $0x10] sm:$0xff]
      %v940 = vld [vmem:[%s5 + $0x18] sm:$0xff]
      %942 = vset.pattern.permute.xlu0 0
      %943 = vperm.xlu0 %942, %v937
      %v944 = vpop.permute.xlu0 %943
      %947 = vset.pattern.permute.xlu0 0
      %948 = vperm.xlu0 %947, %v938
      %v949 = vpop.permute.xlu0 %948
      %952 = vset.pattern.permute.xlu0 0
      %953 = vperm.xlu0 %952, %v939
      %v954 = vpop.permute.xlu0 %953
      %957 = vset.pattern.permute.xlu0 0
      %958 = vperm.xlu0 %957, %v940
      %v959 = vpop.permute.xlu0 %958
      %v961 = vadd.f32 %v921, %v944
      %v962 = vadd.f32 %v922, %v944
      %v963 = vadd.f32 %v923, %v944
      %v964 = vadd.f32 %v924, %v944
      %v965 = vadd.f32 %v925, %v949
      %v966 = vadd.f32 %v926, %v949
      %v967 = vadd.f32 %v927, %v949
      %v968 = vadd.f32 %v928, %v949
      %v969 = vadd.f32 %v929, %v954
      %v970 = vadd.f32 %v930, %v954
      %v971 = vadd.f32 %v931, %v954
      %v972 = vadd.f32 %v932, %v954
      %v973 = vadd.f32 %v933, %v959
      %v974 = vadd.f32 %v934, %v959
      %v975 = vadd.f32 %v935, %v959
      %v976 = vadd.f32 %v936, %v959
      %v977 = vmax.f32 %v961, 0.0
      %v978 = vmax.f32 %v962, 0.0
      %v979 = vmax.f32 %v963, 0.0
      %v980 = vmax.f32 %v964, 0.0
      %v981 = vmax.f32 %v965, 0.0
      %v982 = vmax.f32 %v966, 0.0
      %v983 = vmax.f32 %v967, 0.0
      %v984 = vmax.f32 %v968, 0.0
      %v985 = vmax.f32 %v969, 0.0
      %v986 = vmax.f32 %v970, 0.0
      %v987 = vmax.f32 %v971, 0.0
      %v988 = vmax.f32 %v972, 0.0
      %v989 = vmax.f32 %v973, 0.0
      %v990 = vmax.f32 %v974, 0.0
      %v991 = vmax.f32 %v975, 0.0
      %v992 = vmax.f32 %v976, 0.0
      %v993 = vld [vmem:[%s6] sm:$0xff]
      %v994 = vld [vmem:[%s6 + $0x8] sm:$0xff]
      %v995 = vld [vmem:[%s6 + $0x10] sm:$0xff]
      %v996 = vld [vmem:[%s6 + $0x18] sm:$0xff]
      %998 = vset.pattern.permute.xlu0 0
      %999 = vperm.xlu0 %998, %v993
      %v1000 = vpop.permute.xlu0 %999
      %1003 = vset.pattern.permute.xlu0 0
      %1004 = vperm.xlu0 %1003, %v994
      %v1005 = vpop.permute.xlu0 %1004
      %1008 = vset.pattern.permute.xlu0 0
      %1009 = vperm.xlu0 %1008, %v995
      %v1010 = vpop.permute.xlu0 %1009
      %1013 = vset.pattern.permute.xlu0 0
      %1014 = vperm.xlu0 %1013, %v996
      %v1015 = vpop.permute.xlu0 %1014
      %v1017 = vmul.f32 %v977, %v1000
      %v1018 = vmul.f32 %v978, %v1000
      %v1019 = vmul.f32 %v979, %v1000
      %v1020 = vmul.f32 %v980, %v1000
      %v1021 = vmul.f32 %v981, %v1005
      %v1022 = vmul.f32 %v982, %v1005
      %v1023 = vmul.f32 %v983, %v1005
      %v1024 = vmul.f32 %v984, %v1005
      %v1025 = vmul.f32 %v985, %v1010
      %v1026 = vmul.f32 %v986, %v1010
      %v1027 = vmul.f32 %v987, %v1010
      %v1028 = vmul.f32 %v988, %v1010
      %v1029 = vmul.f32 %v989, %v1015
      %v1030 = vmul.f32 %v990, %v1015
      %v1031 = vmul.f32 %v991, %v1015
      %v1032 = vmul.f32 %v992, %v1015
      %v1033 = vadd.f32 %v1017, %v1021
      %v1034 = vadd.f32 %v1033, %v1025
      %v1035 = vadd.f32 %v1034, %v1029
      %v1036 = vrot.slane %v1035, 4
      %v1037 = vadd.f32 %v1035, %v1036
      %v1038 = vrot.slane %v1037, 2
      %v1039 = vadd.f32 %v1037, %v1038
      %v1040 = vrot.slane %v1039, 1
      %v1041 = vadd.f32 %v1039, %v1040
      %v1042 = vadd.f32 %v1018, %v1022
      %v1043 = vadd.f32 %v1042, %v1026
      %v1044 = vadd.f32 %v1043, %v1030
      %v1045 = vrot.slane %v1044, 4
      %v1046 = vadd.f32 %v1044, %v1045
      %v1047 = vrot.slane %v1046, 2
      %v1048 = vadd.f32 %v1046, %v1047
      %v1049 = vrot.slane %v1048, 1
      %v1050 = vadd.f32 %v1048, %v1049
      %v1051 = vadd.f32 %v1019, %v1023
      %v1052 = vadd.f32 %v1051, %v1027
      %v1053 = vadd.f32 %v1052, %v1031
      %v1054 = vrot.slane %v1053, 4
      %v1055 = vadd.f32 %v1053, %v1054
      %v1056 = vrot.slane %v1055, 2
      %v1057 = vadd.f32 %v1055, %v1056
      %v1058 = vrot.slane %v1057, 1
      %v1059 = vadd.f32 %v1057, %v1058
      %v1060 = vadd.f32 %v1020, %v1024
      %v1061 = vadd.f32 %v1060, %v1028
      %v1062 = vadd.f32 %v1061, %v1032
      %v1063 = vrot.slane %v1062, 4
      %v1064 = vadd.f32 %v1062, %v1063
      %v1065 = vrot.slane %v1064, 2
      %v1066 = vadd.f32 %v1064, %v1065
      %v1067 = vrot.slane %v1066, 1
      %v1068 = vadd.f32 %v1066, %v1067
      %s1069 = sld [smem:[#allocation2]]
      %v1070 = vstv %s1069
      %v1071 = vadd.f32 %v1041, %v1070
      %v1072 = vadd.f32 %v1050, %v1070
      %v1073 = vadd.f32 %v1059, %v1070
      %v1074 = vadd.f32 %v1068, %v1070
      %v1075 = vxor.u32 %v1071, 2147483648
      %v1076 = vxor.u32 %v1072, 2147483648
      %v1077 = vxor.u32 %v1073, 2147483648
      %v1078 = vxor.u32 %v1074, 2147483648
      %v1079 = vmul.f32 %v1075, 1.442695
      %v1080 = vpow.pop %v1079
      %v1081 = vmul.f32 %v1076, 1.442695
      %v1082 = vpow.pop %v1081
      %v1083 = vmul.f32 %v1077, 1.442695
      %v1084 = vpow.pop %v1083
      %v1085 = vmul.f32 %v1078, 1.442695
      %v1086 = vpow.pop %v1085
      %v1087 = vadd.f32 %v1080, 1.0
      %v1088 = vadd.f32 %v1082, 1.0
      %v1089 = vadd.f32 %v1084, 1.0
      %v1090 = vadd.f32 %v1086, 1.0
      %v1091 = vrcp.pop %v1087
      %v1092 = vmul.f32 %v1087, %v1091
      %v1093 = vsub.f32 1.0, %v1092
      %v1094 = vmul.f32 %v1091, %v1093
      %v1095 = vadd.f32 %v1091, %v1094
      %vm1096 = vweird.f32 %v1087
      %vm1097 = vweird.f32 %v1091
      %vm1098 = vmor %vm1096, %vm1097
      %v1099 = vsel %vm1098, %v1091, %v1095
      %v1100 = vand.u32 2147483647, %v1087
      %vm1101 = vcmp.eq.f32.partialorder %v1100, 8.507059e+37
      %v1102 = vand.u32 %v1087, 2147483648
      %v1103 = vor.u32 1.1754944e-38, %v1102
      %v1104 = vsel %vm1101, %v1103, %v1099
      %v1105 = vmul.f32 1.0, %v1104
      %v1106 = vrcp.pop %v1088
      %v1107 = vmul.f32 %v1088, %v1106
      %v1108 = vsub.f32 1.0, %v1107
      %v1109 = vmul.f32 %v1106, %v1108
      %v1110 = vadd.f32 %v1106, %v1109
      %vm1111 = vweird.f32 %v1088
      %vm1112 = vweird.f32 %v1106
      %vm1113 = vmor %vm1111, %vm1112
      %v1114 = vsel %vm1113, %v1106, %v1110
      %v1115 = vand.u32 2147483647, %v1088
      %vm1116 = vcmp.eq.f32.partialorder %v1115, 8.507059e+37
      %v1117 = vand.u32 %v1088, 2147483648
      %v1118 = vor.u32 1.1754944e-38, %v1117
      %v1119 = vsel %vm1116, %v1118, %v1114
      %v1120 = vmul.f32 1.0, %v1119
      %v1121 = vrcp.pop %v1089
      %v1122 = vmul.f32 %v1089, %v1121
      %v1123 = vsub.f32 1.0, %v1122
      %v1124 = vmul.f32 %v1121, %v1123
      %v1125 = vadd.f32 %v1121, %v1124
      %vm1126 = vweird.f32 %v1089
      %vm1127 = vweird.f32 %v1121
      %vm1128 = vmor %vm1126, %vm1127
      %v1129 = vsel %vm1128, %v1121, %v1125
      %v1130 = vand.u32 2147483647, %v1089
      %vm1131 = vcmp.eq.f32.partialorder %v1130, 8.507059e+37
      %v1132 = vand.u32 %v1089, 2147483648
      %v1133 = vor.u32 1.1754944e-38, %v1132
      %v1134 = vsel %vm1131, %v1133, %v1129
      %v1135 = vmul.f32 1.0, %v1134
      %v1136 = vrcp.pop %v1090
      %v1137 = vmul.f32 %v1090, %v1136
      %v1138 = vsub.f32 1.0, %v1137
      %v1139 = vmul.f32 %v1136, %v1138
      %v1140 = vadd.f32 %v1136, %v1139
      %vm1141 = vweird.f32 %v1090
      %vm1142 = vweird.f32 %v1136
      %vm1143 = vmor %vm1141, %vm1142
      %v1144 = vsel %vm1143, %v1136, %v1140
      %v1145 = vand.u32 2147483647, %v1090
      %vm1146 = vcmp.eq.f32.partialorder %v1145, 8.507059e+37
      %v1147 = vand.u32 %v1090, 2147483648
      %v1148 = vor.u32 1.1754944e-38, %v1147
      %v1149 = vsel %vm1146, %v1148, %v1144
      %v1150 = vmul.f32 1.0, %v1149
      %v1155 = vrot.slane %v1120, 7
      %v1156 = vrot.slane %v1135, 6
      %v1157 = vrot.slane %v1150, 5
      %vm1158 = vcmask 1040384
      %v1159 = vsel %vm1158, %v1105, %v1155
      %vm1160 = vcmask 1042434
      %v1161 = vsel %vm1160, %v1156, %v1157
      %v1162 = vsel %vm836, %v1159, %v1161
      %v1164 = vlaneseq
      %vm1165 = vcmp.ge.s32.totalorder %v1164, 0
      %vm1166 = vcmp.lt.s32.totalorder %v1164, 512
      %vm1167 = vmand %vm1165, %vm1166
      %1168 = vst.msk [vmem:[%s328] sm:$0xf] %vm1167, %v1162
      %s1169 = smul.u32 4, %s20
      %p1170 = scmp.lt.s32.totalorder %s1169, 7
      %s1171 = scalar_select %p1170, %s1169, 7
      %s1172 = scalar_lea.vmem %s8, %s1171
      // Predicated region
      $region53: #{ec_cut_forward.1} parent=51 // pred_check
        %p1173 = pneg %p216
      $region54: #{ec_cut_forward.1} parent=51 // pred_check_branch
        %1175 = sbr.rel (%p1173) target = $region56
      $region55: #{ec_cut_forward.1} parent=51 // pred_region
        %s1176 = smul.u32 4, %s20
      $region56: #{ec_cut_forward.1} parent=51 // pred_fallthru
        _
    $region52: #{ec_cut_forward.1} parent=5 // pred_fallthru
      _
    %p1177 = scmp.le.s32.totalorder 2, %s15
    // Predicated region
    $region57: #{ec_cut_forward.1} parent=5 // pred_check
      %p1178 = pneg %p1177
    $region58: #{ec_cut_forward.1} parent=5 // pred_check_branch
      %1180 = sbr.rel (%p1178) target = $region60
    $region59: #{ec_cut_forward.1} parent=5 // pred_region
      %s1181 = ssub.s32 %s15, 2
      // Predicated region
      $region61: #{ec_cut_forward.1} parent=59 // pred_check
        %p1182 = pneg %p222
      $region62: #{ec_cut_forward.1} parent=59 // pred_check_branch
        %1184 = sbr.rel (%p1182) target = $region64
      $region63: #{ec_cut_forward.1} parent=59 // pred_region
        %s1185 = smul.u32 4, %s21
        %p1186 = scmp.lt.s32.totalorder %s1185, 7
        %s1187 = scalar_select %p1186, %s1185, 7
        %s1188 = scalar_lea.vmem %s8, %s1187
      $region64: #{ec_cut_forward.1} parent=59 // pred_fallthru
        _
    $region60: #{ec_cut_forward.1} parent=5 // pred_fallthru
      _
  $region6: #{ec_cut_forward.1} parent=0 // loop_footer
    %s19 = sadd.s32 1, %s15
  $region7: #{ec_cut_forward.1} parent=0 // loop_footer_branch
    %14 = sbr.rel target = $region3
  $region8: #{ec_cut_forward.1} parent=0 // loop_exit
    _

</llo_original>
